<compile_context>
chip_gen: v5e
topology: v5e:2x2
jax: 0.10.0
libtpu: 0.0.40
codegen_flags: <defaults>
</compile_context>

<pallas_src>
import functools

import jax
import jax.numpy as jnp
from jax.experimental import pallas as pl
from jax.experimental.pallas import tpu as pltpu

LANES = 128
SUBLANES = 8
MAX_TILE_ROWS = 2048   # 1 MiB f32 per input block
NUM_SPLITS = 2         # engages both TensorCores on v7x; harmless on 1-TC chips
PAD_LOGIT = -30000.0   # sigmoid -> 0 exactly, softplus -> 0 exactly (f16-safe)


def _round_up(x, m):
    return ((x + m - 1) // m) * m


def _dice_bce_partial_kernel(x_ref, t_ref, inter_ref, psum_ref, tsum_ref, bce_ref):
    """Accumulates lane-parallel partials of the four reductions.

    Outputs (each an (8, 128) f32 block, resident across the reduction axis):
      inter_ref: sum(sigmoid(x) * t)
      psum_ref : sum(sigmoid(x))
      tsum_ref : sum(t)
      bce_ref  : sum(elementwise BCE)
    """
    j = pl.program_id(1)  # reduction axis

    @pl.when(j == 0)
    def _init():
        inter_ref[...] = jnp.zeros_like(inter_ref)
        psum_ref[...] = jnp.zeros_like(psum_ref)
        tsum_ref[...] = jnp.zeros_like(tsum_ref)
        bce_ref[...] = jnp.zeros_like(bce_ref)

    x = x_ref[...].astype(jnp.float32)
    t = t_ref[...].astype(jnp.float32)

    p = jax.nn.sigmoid(x)

    # Stable BCE-with-logits; min(., 100) mirrors PyTorch's -100 log clamp for
    # binary targets (only differs from sigmoid->log when a term exceeds 100).
    bce_elem = jnp.minimum(
        jnp.maximum(x, 0.0) - x * t + jnp.log1p(jnp.exp(-jnp.abs(x))), 100.0
    )

    groups = x.shape[0] // SUBLANES
    shape3 = (groups, SUBLANES, LANES)
    inter_ref[...] += jnp.sum((p * t).reshape(shape3), axis=0)
    psum_ref[...] += jnp.sum(p.reshape(shape3), axis=0)
    tsum_ref[...] += jnp.sum(t.reshape(shape3), axis=0)
    bce_ref[...] += jnp.sum(bce_elem.reshape(shape3), axis=0)


@functools.partial(jax.jit, static_argnames=("Lambda", "smooth"))
def dice_bce_loss(inputs, targets, Lambda=1, smooth=1):
    """Pallas implementation of DiceBCELoss.forward (returns a scalar f32)."""
    n = inputs.size
    assert n == targets.size

    x_flat = inputs.reshape(-1)
    t_flat = targets.reshape(-1)

    # Tiling: lane-dense (rows, 128) slab, big row tiles, optional 2-way split.
    rows = pl.cdiv(n, LANES)
    tile_rows = min(MAX_TILE_ROWS, _round_up(rows, SUBLANES))
    steps_total = pl.cdiv(rows, tile_rows)
    num_splits = min(NUM_SPLITS, steps_total)
    steps_per_split = pl.cdiv(steps_total, num_splits)
    rows_padded = tile_rows * steps_per_split * num_splits

    pad_elems = rows_padded * LANES - n
    if pad_elems:
        # Padding contributes exactly 0 to every partial sum (see kernel notes).
        x_flat = jnp.pad(x_flat, (0, pad_elems), constant_values=PAD_LOGIT)
        t_flat = jnp.pad(t_flat, (0, pad_elems), constant_values=0)

    x2d = x_flat.reshape(rows_padded, LANES)
    t2d = t_flat.reshape(rows_padded, LANES)

    grid = (num_splits, steps_per_split)
    in_map = lambda s, j: (s * steps_per_split + j, 0)
    out_map = lambda s, j: (s, 0)
    part_shape = jax.ShapeDtypeStruct((num_splits * SUBLANES, LANES), jnp.float32)
    part_spec = pl.BlockSpec((SUBLANES, LANES), out_map)

    inter_p, psum_p, tsum_p, bce_p = pl.pallas_call(
        _dice_bce_partial_kernel,
        out_shape=(part_shape, part_shape, part_shape, part_shape),
        grid_spec=pltpu.PrefetchScalarGridSpec(
            num_scalar_prefetch=0,
            grid=grid,
            in_specs=[
                pl.BlockSpec((tile_rows, LANES), in_map),
                pl.BlockSpec((tile_rows, LANES), in_map),
            ],
            out_specs=[part_spec, part_spec, part_spec, part_spec],
        ),
        compiler_params=pltpu.CompilerParams(
            dimension_semantics=("parallel", "arbitrary"),
        ),
    )(x2d, t2d)

    # Tiny final reductions + scalar glue (dice ratio, mean, Lambda weighting).
    intersection = jnp.sum(inter_p)
    sum_p = jnp.sum(psum_p)
    sum_t = jnp.sum(tsum_p)
    bce_sum = jnp.sum(bce_p)

    dice_loss = 1.0 - (intersection + smooth) / (sum_p + sum_t + smooth)
    bce = bce_sum / n
    return bce + (1.0 / Lambda) * dice_loss


def _reference(inputs, targets, Lambda=1, smooth=1):
    """Pure-JAX reference matching PyTorch semantics (log clamp at -100)."""
    x = inputs.astype(jnp.float32).reshape(-1)
    t = targets.astype(jnp.float32).reshape(-1)
    p = jax.nn.sigmoid(x)
    intersection = jnp.sum(p * t)
    dice = 1.0 - (intersection + smooth) / (jnp.sum(p) + jnp.sum(t) + smooth)
    log_p = jnp.maximum(jnp.log(p), -100.0)
    log_1mp = jnp.maximum(jnp.log1p(-p), -100.0)
    bce = jnp.mean(-(t * log_p + (1.0 - t) * log_1mp))
    return bce + (1.0 / Lambda) * dice


if __name__ == "__main__":
    key = jax.random.PRNGKey(0)
    k1, k2 = jax.random.split(key)

    # NCHW logits and binary targets (segmentation-style).
    B, C, H, W = 2, 4, 16, 16
    inputs = jax.random.normal(k1, (B, C, H, W), dtype=jnp.float32)
    targets = (jax.random.uniform(k2, (B, C, H, W)) > 0.5).astype(jnp.float32)

    loss = dice_bce_loss(inputs, targets, Lambda=1, smooth=1)
    jax.block_until_ready(loss)

    ref = _reference(inputs, targets, Lambda=1, smooth=1)
    assert jnp.allclose(loss, ref, rtol=1e-5, atol=1e-5), (loss, ref)

    print("KERNEL_OK")
</pallas_src>

<mosaic_0001>
module attributes {stable_mosaic.version = 11 : i64} {
  func.func @_dice_bce_partial_kernel(%arg0: i32, %arg1: i32, %arg2: memref<16x128xf32, #tpu.memory_space<vmem>>, %arg3: memref<16x128xf32, #tpu.memory_space<vmem>>, %arg4: memref<8x128xf32, #tpu.memory_space<vmem>>, %arg5: memref<8x128xf32, #tpu.memory_space<vmem>>, %arg6: memref<8x128xf32, #tpu.memory_space<vmem>>, %arg7: memref<8x128xf32, #tpu.memory_space<vmem>>) attributes {dimension_semantics = [#tpu.dimension_semantics<parallel>, #tpu.dimension_semantics<arbitrary>], iteration_bounds = array<i64: 1, 1>, scalar_prefetch = 0 : i64, scratch_operands = 0 : i64, tpu.core_type = #tpu.core_type<tc>, window_params = [{transform_indices = @transform_0, window_bounds = array<i64: 16, 128>}, {transform_indices = @transform_1, window_bounds = array<i64: 16, 128>}, {transform_indices = @transform_2, window_bounds = array<i64: 8, 128>}, {transform_indices = @transform_3, window_bounds = array<i64: 8, 128>}, {transform_indices = @transform_4, window_bounds = array<i64: 8, 128>}, {transform_indices = @transform_5, window_bounds = array<i64: 8, 128>}]} {
    %c0_i32 = arith.constant 0 : i32
    %0 = arith.cmpi eq, %arg1, %c0_i32 : i32
    %1 = arith.extui %0 : i1 to i32
    %c0_i32_0 = arith.constant 0 : i32
    %2 = arith.cmpi ne, %1, %c0_i32_0 : i32
    scf.if %2 {
      %cst_27 = arith.constant 0.000000e+00 : f32
      %43 = vector.broadcast %cst_27 : f32 to vector<8x128xf32>
      %c0_28 = arith.constant 0 : index
      %c0_29 = arith.constant 0 : index
      %44 = vector.load %arg4[%c0_28, %c0_29] : memref<8x128xf32, #tpu.memory_space<vmem>>, vector<8x128xf32>
      tpu.vector_store %arg4[%c0_28, %c0_29], %43 {strides = array<i32>} : memref<8x128xf32, #tpu.memory_space<vmem>>, vector<8x128xf32>,
      %cst_30 = arith.constant 0.000000e+00 : f32
      %45 = vector.broadcast %cst_30 : f32 to vector<8x128xf32>
      %c0_31 = arith.constant 0 : index
      %c0_32 = arith.constant 0 : index
      %46 = vector.load %arg5[%c0_31, %c0_32] : memref<8x128xf32, #tpu.memory_space<vmem>>, vector<8x128xf32>
      tpu.vector_store %arg5[%c0_31, %c0_32], %45 {strides = array<i32>} : memref<8x128xf32, #tpu.memory_space<vmem>>, vector<8x128xf32>,
      %cst_33 = arith.constant 0.000000e+00 : f32
      %47 = vector.broadcast %cst_33 : f32 to vector<8x128xf32>
      %c0_34 = arith.constant 0 : index
      %c0_35 = arith.constant 0 : index
      %48 = vector.load %arg6[%c0_34, %c0_35] : memref<8x128xf32, #tpu.memory_space<vmem>>, vector<8x128xf32>
      tpu.vector_store %arg6[%c0_34, %c0_35], %47 {strides = array<i32>} : memref<8x128xf32, #tpu.memory_space<vmem>>, vector<8x128xf32>,
      %cst_36 = arith.constant 0.000000e+00 : f32
      %49 = vector.broadcast %cst_36 : f32 to vector<8x128xf32>
      %c0_37 = arith.constant 0 : index
      %c0_38 = arith.constant 0 : index
      %50 = vector.load %arg7[%c0_37, %c0_38] : memref<8x128xf32, #tpu.memory_space<vmem>>, vector<8x128xf32>
      tpu.vector_store %arg7[%c0_37, %c0_38], %49 {strides = array<i32>} : memref<8x128xf32, #tpu.memory_space<vmem>>, vector<8x128xf32>,
    } else {
    }
    %c0 = arith.constant 0 : index
    %c0_1 = arith.constant 0 : index
    %3 = vector.load %arg2[%c0, %c0_1] : memref<16x128xf32, #tpu.memory_space<vmem>>, vector<16x128xf32>
    %c0_2 = arith.constant 0 : index
    %c0_3 = arith.constant 0 : index
    %4 = vector.load %arg3[%c0_2, %c0_3] : memref<16x128xf32, #tpu.memory_space<vmem>>, vector<16x128xf32>
    %5 = arith.negf %3 : vector<16x128xf32>
    %6 = math.exp %5 : vector<16x128xf32>
    %cst = arith.constant 1.000000e+00 : f32
    %7 = vector.broadcast %cst : f32 to vector<16x128xf32>
    %8 = arith.addf %7, %6 : vector<16x128xf32>
    %9 = arith.divf %7, %8 : vector<16x128xf32>
    %cst_4 = arith.constant 0.000000e+00 : f32
    %10 = vector.broadcast %cst_4 : f32 to vector<16x128xf32>
    %11 = arith.maximumf %3, %10 : vector<16x128xf32>
    %12 = arith.mulf %3, %4 : vector<16x128xf32>
    %13 = arith.subf %11, %12 : vector<16x128xf32>
    %14 = math.absf %3 : vector<16x128xf32>
    %cst_5 = arith.constant 0.000000e+00 : f32
    %15 = vector.broadcast %cst_5 : f32 to vector<16x128xf32>
    %16 = arith.subf %15, %14 : vector<16x128xf32>
    %17 = math.exp %16 : vector<16x128xf32>
    %18 = math.log1p %17 : vector<16x128xf32>
    %19 = arith.addf %13, %18 : vector<16x128xf32>
    %cst_6 = arith.constant 1.000000e+02 : f32
    %20 = vector.broadcast %cst_6 : f32 to vector<16x128xf32>
    %21 = arith.minimumf %19, %20 : vector<16x128xf32>
    %c0_7 = arith.constant 0 : index
    %c0_8 = arith.constant 0 : index
    %22 = vector.load %arg4[%c0_7, %c0_8] : memref<8x128xf32, #tpu.memory_space<vmem>>, vector<8x128xf32>
    %23 = arith.mulf %9, %4 : vector<16x128xf32>
    %24 = vector.shape_cast %23 : vector<16x128xf32> to vector<2x8x128xf32>
    %cst_9 = arith.constant dense<0.000000e+00> : vector<8x128xf32>
    %25 = vector.multi_reduction <add>, %24, %cst_9 [0] : vector<2x8x128xf32> to vector<8x128xf32>
    %26 = arith.addf %22, %25 : vector<8x128xf32>
    %c0_10 = arith.constant 0 : index
    %c0_11 = arith.constant 0 : index
    %27 = vector.load %arg4[%c0_10, %c0_11] : memref<8x128xf32, #tpu.memory_space<vmem>>, vector<8x128xf32>
    tpu.vector_store %arg4[%c0_10, %c0_11], %26 {strides = array<i32>} : memref<8x128xf32, #tpu.memory_space<vmem>>, vector<8x128xf32>,
    %c0_12 = arith.constant 0 : index
    %c0_13 = arith.constant 0 : index
    %28 = vector.load %arg5[%c0_12, %c0_13] : memref<8x128xf32, #tpu.memory_space<vmem>>, vector<8x128xf32>
    %29 = vector.shape_cast %9 : vector<16x128xf32> to vector<2x8x128xf32>
    %cst_14 = arith.constant dense<0.000000e+00> : vector<8x128xf32>
    %30 = vector.multi_reduction <add>, %29, %cst_14 [0] : vector<2x8x128xf32> to vector<8x128xf32>
    %31 = arith.addf %28, %30 : vector<8x128xf32>
    %c0_15 = arith.constant 0 : index
    %c0_16 = arith.constant 0 : index
    %32 = vector.load %arg5[%c0_15, %c0_16] : memref<8x128xf32, #tpu.memory_space<vmem>>, vector<8x128xf32>
    tpu.vector_store %arg5[%c0_15, %c0_16], %31 {strides = array<i32>} : memref<8x128xf32, #tpu.memory_space<vmem>>, vector<8x128xf32>,
    %c0_17 = arith.constant 0 : index
    %c0_18 = arith.constant 0 : index
    %33 = vector.load %arg6[%c0_17, %c0_18] : memref<8x128xf32, #tpu.memory_space<vmem>>, vector<8x128xf32>
    %34 = vector.shape_cast %4 : vector<16x128xf32> to vector<2x8x128xf32>
    %cst_19 = arith.constant dense<0.000000e+00> : vector<8x128xf32>
    %35 = vector.multi_reduction <add>, %34, %cst_19 [0] : vector<2x8x128xf32> to vector<8x128xf32>
    %36 = arith.addf %33, %35 : vector<8x128xf32>
    %c0_20 = arith.constant 0 : index
    %c0_21 = arith.constant 0 : index
    %37 = vector.load %arg6[%c0_20, %c0_21] : memref<8x128xf32, #tpu.memory_space<vmem>>, vector<8x128xf32>
    tpu.vector_store %arg6[%c0_20, %c0_21], %36 {strides = array<i32>} : memref<8x128xf32, #tpu.memory_space<vmem>>, vector<8x128xf32>,
    %c0_22 = arith.constant 0 : index
    %c0_23 = arith.constant 0 : index
    %38 = vector.load %arg7[%c0_22, %c0_23] : memref<8x128xf32, #tpu.memory_space<vmem>>, vector<8x128xf32>
    %39 = vector.shape_cast %21 : vector<16x128xf32> to vector<2x8x128xf32>
    %cst_24 = arith.constant dense<0.000000e+00> : vector<8x128xf32>
    %40 = vector.multi_reduction <add>, %39, %cst_24 [0] : vector<2x8x128xf32> to vector<8x128xf32>
    %41 = arith.addf %38, %40 : vector<8x128xf32>
    %c0_25 = arith.constant 0 : index
    %c0_26 = arith.constant 0 : index
    %42 = vector.load %arg7[%c0_25, %c0_26] : memref<8x128xf32, #tpu.memory_space<vmem>>, vector<8x128xf32>
    tpu.vector_store %arg7[%c0_25, %c0_26], %41 {strides = array<i32>} : memref<8x128xf32, #tpu.memory_space<vmem>>, vector<8x128xf32>,
    return
  }
  func.func @transform_0(%arg0: i32, %arg1: i32) -> (i32, i32) {
    %c1_i32 = arith.constant 1 : i32
    %0 = arith.muli %arg0, %c1_i32 : i32
    %1 = arith.addi %0, %arg1 : i32
    %c0_i32 = arith.constant 0 : i32
    %c0_i32_0 = arith.constant 0 : i32
    return %1, %c0_i32 : i32, i32
  }
  func.func @transform_1(%arg0: i32, %arg1: i32) -> (i32, i32) {
    %c1_i32 = arith.constant 1 : i32
    %0 = arith.muli %arg0, %c1_i32 : i32
    %1 = arith.addi %0, %arg1 : i32
    %c0_i32 = arith.constant 0 : i32
    %c0_i32_0 = arith.constant 0 : i32
    return %1, %c0_i32 : i32, i32
  }
  func.func @transform_2(%arg0: i32, %arg1: i32) -> (i32, i32) {
    %c0_i32 = arith.constant 0 : i32
    %c0_i32_0 = arith.constant 0 : i32
    return %arg0, %c0_i32 : i32, i32
  }
  func.func @transform_3(%arg0: i32, %arg1: i32) -> (i32, i32) {
    %c0_i32 = arith.constant 0 : i32
    %c0_i32_0 = arith.constant 0 : i32
    return %arg0, %c0_i32 : i32, i32
  }
  func.func @transform_4(%arg0: i32, %arg1: i32) -> (i32, i32) {
    %c0_i32 = arith.constant 0 : i32
    %c0_i32_0 = arith.constant 0 : i32
    return %arg0, %c0_i32 : i32, i32
  }
  func.func @transform_5(%arg0: i32, %arg1: i32) -> (i32, i32) {
    %c0_i32 = arith.constant 0 : i32
    %c0_i32_0 = arith.constant 0 : i32
    return %arg0, %c0_i32 : i32, i32
  }
}

</mosaic_0001>

<llo_original>
// kernel: dice_bce_loss.1
$region0: #{dice_bce_loss.1}
  #allocation0 [shape = 'u32[]', space=smem, size = 0x4, offset = 0x4, fixed_abs, tag = 'smem constant byte address 0x4 - core index']
  #allocation1 [shape = 'u32[72,128]{1,0:T(1,128)}', space=vmem, size = 0x9000, scoped, tag = 'internal scratch']
  %s0 = inlined_call_operand.vmem [shape: f32[16,128], index: 0, kind: input, shape index: {}]
  %s1 = inlined_call_operand.vmem [shape: f32[16,128], index: 1, kind: input, shape index: {}]
  %s2 = inlined_call_operand.vmem [shape: f32[8,128], index: 2, kind: output, shape index: {0}]
  %s3 = inlined_call_operand.vmem [shape: f32[8,128], index: 3, kind: output, shape index: {1}]
  %s4 = inlined_call_operand.vmem [shape: f32[8,128], index: 4, kind: output, shape index: {2}]
  %s5 = inlined_call_operand.vmem [shape: f32[8,128], index: 5, kind: output, shape index: {3}]
  %6 = xla_tuple %s2, %s3, %s4, %s5
  %s7 = sld [smem:[#allocation0]]
  $region46: #{dice_bce_loss.1} parent=0
    _
  %s9 = ssub.s32 1, %s7
  %s10 = scalar_select 0, %s9, %s7
  // Predicated region
  $region2: #{dice_bce_loss.1} parent=0 // pred_check
    _
  $region3: #{dice_bce_loss.1} parent=0 // pred_check_branch
    %12 = sbr.rel (0) target = $region5
  $region4: #{dice_bce_loss.1} parent=0 // pred_region
    %s13 = sadd.s32 0, 0
    %s14 = smul.u32 2, %s13
    %p15 = scmp.lt.s32.totalorder %s14, 1
    %s16 = scalar_select %p15, %s14, 1
    %s17 = smul.addr %s16, 8
    %s18 = scalar_lea.vmem %s0, %s17
    %s19 = sadd.s32 0, 0
    %s20 = smul.u32 2, %s19
  $region5: #{dice_bce_loss.1} parent=0 // pred_fallthru
    _
  // Predicated region
  $region6: #{dice_bce_loss.1} parent=0 // pred_check
    _
  $region7: #{dice_bce_loss.1} parent=0 // pred_check_branch
    %22 = sbr.rel (0) target = $region9
  $region8: #{dice_bce_loss.1} parent=0 // pred_region
    %s23 = sadd.s32 0, 0
    %s24 = smul.u32 2, %s23
    %p25 = scmp.lt.s32.totalorder %s24, 1
    %s26 = scalar_select %p25, %s24, 1
    %s27 = smul.addr %s26, 8
    %s28 = scalar_lea.vmem %s1, %s27
    %s29 = sadd.s32 0, 0
    %s30 = smul.u32 2, %s29
  $region9: #{dice_bce_loss.1} parent=0 // pred_fallthru
    _
  %s31 = sadd.s32 0, 0
  %s32 = smul.u32 2, %s31
  %p33 = scmp.lt.s32.totalorder %s32, 1
  %s34 = scalar_select %p33, %s32, 1
  %s35 = smul.addr %s34, 8
  %s36 = scalar_lea.vmem %s0, %s35
  %s37 = sadd.s32 0, 0
  %s38 = smul.u32 2, %s37
  %p39 = scmp.lt.s32.totalorder %s38, 1
  %s40 = scalar_select %p39, %s38, 1
  %s41 = smul.addr %s40, 8
  %s42 = scalar_lea.vmem %s1, %s41
  %s43 = sadd.s32 0, 0
  %s44 = smul.u32 2, %s43
  %p45 = scmp.lt.s32.totalorder %s44, 1
  %s46 = scalar_select %p45, %s44, 1
  %s47 = smul.addr %s46, 8
  %s48 = scalar_lea.vmem %s0, %s47
  %s49 = sadd.s32 0, 0
  %s50 = smul.u32 2, %s49
  %s51 = sadd.s32 0, 0
  %s52 = smul.u32 2, %s51
  %p53 = scmp.lt.s32.totalorder %s52, 1
  %s54 = scalar_select %p53, %s52, 1
  %s55 = smul.addr %s54, 8
  %s56 = scalar_lea.vmem %s1, %s55
  %s57 = sadd.s32 0, 0
  %s58 = smul.u32 2, %s57
  %p59 = scmp.eq.s32.totalorder 0, 0
  // Predicated region
  $region10: #{dice_bce_loss.1} parent=0 // pred_check
    %p60 = pneg %p59
  $region11: #{dice_bce_loss.1} parent=0 // pred_check_branch
    %62 = sbr.rel (%p60) target = $region13
  $region12: #{dice_bce_loss.1} parent=0 // pred_region
    %63 = vst [vmem:[%s2] sm:$0xff] 0.0
    %64 = vst [vmem:[%s3] sm:$0xff] 0.0
    %65 = vst [vmem:[%s4] sm:$0xff] 0.0
    %66 = vst [vmem:[%s5] sm:$0xff] 0.0
  $region13: #{dice_bce_loss.1} parent=0 // pred_fallthru
    _
  %v67 = vld [vmem:[%s48] sm:$0xff]
  %v68 = vld [vmem:[%s48 + $0x8] sm:$0xff]
  %v69 = vld [vmem:[%s56] sm:$0xff]
  %v70 = vld [vmem:[%s56 + $0x8] sm:$0xff]
  %v71 = vxor.u32 %v67, 2147483648
  %v72 = vxor.u32 %v68, 2147483648
  %v73 = vmul.f32 %v71, 1.442695
  %v74 = vpow.pop %v73
  %v75 = vmul.f32 %v72, 1.442695
  %v76 = vpow.pop %v75
  %v77 = vadd.f32 %v74, 1.0
  %v78 = vadd.f32 %v76, 1.0
  %v79 = vrcp.pop %v77
  %v80 = vmul.f32 %v77, %v79
  %v81 = vsub.f32 1.0, %v80
  %v82 = vmul.f32 %v79, %v81
  %v83 = vadd.f32 %v79, %v82
  %vm84 = vweird.f32 %v77
  %vm85 = vweird.f32 %v79
  %vm86 = vmor %vm84, %vm85
  %v87 = vsel %vm86, %v79, %v83
  %v88 = vand.u32 2147483647, %v77
  %vm89 = vcmp.eq.f32.partialorder %v88, 8.507059e+37
  %v90 = vand.u32 %v77, 2147483648
  %v91 = vor.u32 1.1754944e-38, %v90
  %v92 = vsel %vm89, %v91, %v87
  %v93 = vmul.f32 1.0, %v92
  %v94 = vrcp.pop %v78
  %v95 = vmul.f32 %v78, %v94
  %v96 = vsub.f32 1.0, %v95
  %v97 = vmul.f32 %v94, %v96
  %v98 = vadd.f32 %v94, %v97
  %vm99 = vweird.f32 %v78
  %vm100 = vweird.f32 %v94
  %vm101 = vmor %vm99, %vm100
  %v102 = vsel %vm101, %v94, %v98
  %v103 = vand.u32 2147483647, %v78
  %vm104 = vcmp.eq.f32.partialorder %v103, 8.507059e+37
  %v105 = vand.u32 %v78, 2147483648
  %v106 = vor.u32 1.1754944e-38, %v105
  %v107 = vsel %vm104, %v106, %v102
  %v108 = vmul.f32 1.0, %v107
  %v109 = vmax.f32 %v67, 0.0
  %v110 = vmax.f32 %v68, 0.0
  %v111 = vmul.f32 %v67, %v69
  %v112 = vmul.f32 %v68, %v70
  %v113 = vsub.f32 %v109, %v111
  %v114 = vsub.f32 %v110, %v112
  %v115 = vand.u32 2147483647, %v67
  %v116 = vand.u32 2147483647, %v68
  %v117 = vsub.f32 0.0, %v115
  %v118 = vsub.f32 0.0, %v116
  %v119 = vmul.f32 %v117, 1.442695
  %v120 = vpow.pop %v119
  %v121 = vmul.f32 %v118, 1.442695
  %v122 = vpow.pop %v121
  %v123 = vadd.f32 %v120, 1.0
  %v124 = vlog2.pop %v123
  %v125 = vmul.f32 %v124, 0.6931472
  %v126 = vmul.f32 -0.5, %v120
  %v127 = vadd.f32 %v126, 1.0
  %v128 = vmul.f32 %v127, %v120
  %v129 = vand.u32 2147483647, %v120
  %vm130 = vcmp.lt.f32.partialorder %v129, 0.0004427343
  %v131 = vsel %vm130, %v128, %v125
  %v132 = vadd.f32 %v122, 1.0
  %v133 = vlog2.pop %v132
  %v134 = vmul.f32 %v133, 0.6931472
  %v135 = vmul.f32 -0.5, %v122
  %v136 = vadd.f32 %v135, 1.0
  %v137 = vmul.f32 %v136, %v122
  %v138 = vand.u32 2147483647, %v122
  %vm139 = vcmp.lt.f32.partialorder %v138, 0.0004427343
  %v140 = vsel %vm139, %v137, %v134
  %v141 = vadd.f32 %v113, %v131
  %v142 = vadd.f32 %v114, %v140
  %v143 = vmin.f32 %v141, 100.0
  %v144 = vmin.f32 %v142, 100.0
  %v145 = vld [vmem:[%s2] sm:$0xff]
  %v146 = vmul.f32 %v93, %v69
  %v147 = vmul.f32 %v108, %v70
  %v148 = vadd.f32 %v146, %v147
  %v149 = vadd.f32 %v145, %v148
  %150 = vst [vmem:[%s2] sm:$0xff] %v149
  %v151 = vld [vmem:[%s3] sm:$0xff]
  %v152 = vadd.f32 %v93, %v108
  %v153 = vadd.f32 %v151, %v152
  %154 = vst [vmem:[%s3] sm:$0xff] %v153
  %v155 = vld [vmem:[%s4] sm:$0xff]
  %v156 = vadd.f32 %v69, %v70
  %v157 = vadd.f32 %v155, %v156
  %158 = vst [vmem:[%s4] sm:$0xff] %v157
  %v159 = vld [vmem:[%s5] sm:$0xff]
  %v160 = vadd.f32 %v143, %v144
  %v161 = vadd.f32 %v159, %v160
  %162 = vst [vmem:[%s5] sm:$0xff] %v161
  // Predicated region
  $region14: #{dice_bce_loss.1} parent=0 // pred_check
    _
  $region15: #{dice_bce_loss.1} parent=0 // pred_check_branch
    %164 = sbr.rel (0) target = $region17
  $region16: #{dice_bce_loss.1} parent=0 // pred_region
    _
  $region17: #{dice_bce_loss.1} parent=0 // pred_fallthru
    _
  // Predicated region
  $region18: #{dice_bce_loss.1} parent=0 // pred_check
    _
  $region19: #{dice_bce_loss.1} parent=0 // pred_check_branch
    %166 = sbr.rel (0) target = $region21
  $region20: #{dice_bce_loss.1} parent=0 // pred_region
    _
  $region21: #{dice_bce_loss.1} parent=0 // pred_fallthru
    _
  // Predicated region
  $region22: #{dice_bce_loss.1} parent=0 // pred_check
    _
  $region23: #{dice_bce_loss.1} parent=0 // pred_check_branch
    %168 = sbr.rel (0) target = $region25
  $region24: #{dice_bce_loss.1} parent=0 // pred_region
    _
  $region25: #{dice_bce_loss.1} parent=0 // pred_fallthru
    _
  // Predicated region
  $region26: #{dice_bce_loss.1} parent=0 // pred_check
    _
  $region27: #{dice_bce_loss.1} parent=0 // pred_check_branch
    %170 = sbr.rel (0) target = $region29
  $region28: #{dice_bce_loss.1} parent=0 // pred_region
    _
  $region29: #{dice_bce_loss.1} parent=0 // pred_fallthru
    _
  // Predicated region
  $region30: #{dice_bce_loss.1} parent=0 // pred_check
    _
  $region31: #{dice_bce_loss.1} parent=0 // pred_check_branch
    %172 = sbr.rel (0) target = $region33
  $region32: #{dice_bce_loss.1} parent=0 // pred_region
    _
  $region33: #{dice_bce_loss.1} parent=0 // pred_fallthru
    _
  // Predicated region
  $region34: #{dice_bce_loss.1} parent=0 // pred_check
    _
  $region35: #{dice_bce_loss.1} parent=0 // pred_check_branch
    %174 = sbr.rel (0) target = $region37
  $region36: #{dice_bce_loss.1} parent=0 // pred_region
    _
  $region37: #{dice_bce_loss.1} parent=0 // pred_fallthru
    _
  // Predicated region
  $region38: #{dice_bce_loss.1} parent=0 // pred_check
    _
  $region39: #{dice_bce_loss.1} parent=0 // pred_check_branch
    %176 = sbr.rel (0) target = $region41
  $region40: #{dice_bce_loss.1} parent=0 // pred_region
    _
  $region41: #{dice_bce_loss.1} parent=0 // pred_fallthru
    _
  // Predicated region
  $region42: #{dice_bce_loss.1} parent=0 // pred_check
    _
  $region43: #{dice_bce_loss.1} parent=0 // pred_check_branch
    %178 = sbr.rel (0) target = $region45
  $region44: #{dice_bce_loss.1} parent=0 // pred_region
    _
  $region45: #{dice_bce_loss.1} parent=0 // pred_fallthru
    _

</llo_original>
